<compile_context>
chip_gen: v7x
topology: tpu7x:2x2x1
jax: 0.10.0
libtpu: 0.0.40
codegen_flags: <defaults>
</compile_context>

<pallas_src>
import functools
import math

import jax
import jax.numpy as jnp
from jax.experimental import pallas as pl
from jax.experimental.pallas import tpu as pltpu


# ------------------------------ small helpers -------------------------------

def _pick_tile(n, candidates):
    """Largest candidate tile that divides n, else the full extent."""
    for c in candidates:
        if n % c == 0:
            return c
    return n


def _mosaic_params(dim_sems, block_bytes):
    """CompilerParams with explicit, footprint-sized scoped-VMEM limit."""
    limit = int(min(max(2 * block_bytes + (8 << 20), 16 << 20), 64 << 20))
    return pltpu.CompilerParams(dimension_semantics=dim_sems,
                                vmem_limit_bytes=limit)


# ----------------------------- Pallas kernels ------------------------------

def _linear_kernel(x_ref, w_ref, b_ref, *rest, activation):
    """Tiled matmul with f32 accumulator; bias/activation/residual fused."""
    if len(rest) == 3:
        r_ref, o_ref, acc_ref = rest
    else:
        r_ref = None
        o_ref, acc_ref = rest
    k = pl.program_id(2)

    @pl.when(k == 0)
    def _():
        acc_ref[...] = jnp.zeros_like(acc_ref)

    acc_ref[...] += jnp.dot(x_ref[...], w_ref[...],
                            preferred_element_type=jnp.float32)

    @pl.when(k == pl.num_programs(2) - 1)
    def _():
        y = acc_ref[...] + b_ref[...]
        if activation == "relu":
            y = jnp.maximum(y, 0.0)
        elif activation == "gelu":
            # TODO(synk): PyTorch nn.GELU default is the exact erf form; the
            # tanh approximation is used here (guaranteed Mosaic lowering).
            y = jax.nn.gelu(y, approximate=True)
        if r_ref is not None:
            y = y + r_ref[...]
        o_ref[...] = y.astype(o_ref.dtype)


def pallas_linear(x, w, b, activation=None, residual=None,
                  out_dtype=jnp.float32):
    """(M,K) @ (K,N) + b, bf16 operands / f32 accumulate, fused epilogue."""
    M, K = x.shape
    N = w.shape[1]
    tm = _pick_tile(M, (512, 256, 128, 64, 32, 16, 8))
    tn = _pick_tile(N, (256, 128))
    tk = _pick_tile(K, (512, 256, 128))
    grid = (M // tm, N // tn, K // tk)

    x = x.astype(jnp.bfloat16)
    w = w.astype(jnp.bfloat16)
    b2 = b.reshape(1, N).astype(jnp.float32)

    in_specs = [
        pl.BlockSpec((tm, tk), lambda i, j, k: (i, k)),
        pl.BlockSpec((tk, tn), lambda i, j, k: (k, j)),
        pl.BlockSpec((1, tn), lambda i, j, k: (0, j)),
    ]
    args = [x, w, b2]
    if residual is not None:
        in_specs.append(pl.BlockSpec((tm, tn), lambda i, j, k: (i, j)))
        args.append(residual.astype(jnp.float32))

    out_bytes = tm * tn * (2 if out_dtype == jnp.bfloat16 else 4)
    block_bytes = (tm * tk * 2 + tk * tn * 2 + tn * 4 + out_bytes
                   + (tm * tn * 4 if residual is not None else 0)
                   + tm * tn * 4)  # acc scratch

    return pl.pallas_call(
        functools.partial(_linear_kernel, activation=activation),
        out_shape=jax.ShapeDtypeStruct((M, N), out_dtype),
        grid=grid,
        in_specs=in_specs,
        out_specs=pl.BlockSpec((tm, tn), lambda i, j, k: (i, j)),
        scratch_shapes=[pltpu.VMEM((tm, tn), jnp.float32)],
        compiler_params=_mosaic_params(
            ("parallel", "parallel", "arbitrary"), block_bytes),
    )(*args)


def _layernorm_kernel(*refs, eps, with_residual):
    if with_residual:
        x_ref, r_ref, w_ref, b_ref, o_ref = refs
        x = x_ref[...].astype(jnp.float32) + r_ref[...].astype(jnp.float32)
    else:
        x_ref, w_ref, b_ref, o_ref = refs
        x = x_ref[...].astype(jnp.float32)
    mu = jnp.mean(x, axis=-1, keepdims=True)
    var = jnp.mean(jnp.square(x - mu), axis=-1, keepdims=True)
    y = (x - mu) * jax.lax.rsqrt(var + eps)
    o_ref[...] = (y * w_ref[...] + b_ref[...]).astype(o_ref.dtype)


def pallas_layer_norm(x, weight, bias, eps, residual=None):
    """LayerNorm over the last dim of (M, D); optionally fuses residual add."""
    M, D = x.shape
    tm = _pick_tile(M, (512, 256, 128, 64, 32, 16, 8))
    grid = (M // tm,)
    row = pl.BlockSpec((tm, D), lambda i: (i, 0))
    vec = pl.BlockSpec((1, D), lambda i: (0, 0))

    args = [x.astype(jnp.float32)]
    in_specs = [row]
    if residual is not None:
        args.append(residual.astype(jnp.float32))
        in_specs.append(row)
    args += [weight.reshape(1, D).astype(jnp.float32),
             bias.reshape(1, D).astype(jnp.float32)]
    in_specs += [vec, vec]

    block_bytes = tm * D * 4 * (3 if residual is not None else 2) + 2 * D * 4
    return pl.pallas_call(
        functools.partial(_layernorm_kernel, eps=eps,
                          with_residual=residual is not None),
        out_shape=jax.ShapeDtypeStruct((M, D), jnp.float32),
        grid=grid,
        in_specs=in_specs,
        out_specs=row,
        compiler_params=_mosaic_params(("parallel",), block_bytes),
    )(*args)


def _mha_core(q, k, v, num_heads, scale):
    """Per-head attention on VMEM tiles; bf16 matmuls, f32 softmax stats."""
    d = q.shape[-1]
    dh = d // num_heads
    outs = []
    for h in range(num_heads):
        sl = slice(h * dh, (h + 1) * dh)
        # fold scale into q (Sq x dh muls instead of Sq x Sk)
        qh = (q[:, sl].astype(jnp.float32) * scale).astype(jnp.bfloat16)
        s = jax.lax.dot_general(qh, k[:, sl], (((1,), (1,)), ((), ())),
                                preferred_element_type=jnp.float32)
        m = jnp.max(s, axis=-1, keepdims=True)
        p = jnp.exp(s - m)
        l = jnp.sum(p, axis=-1, keepdims=True)
        o = jnp.dot(p.astype(jnp.bfloat16), v[:, sl],
                    preferred_element_type=jnp.float32)
        # deferred normalization via EUP reciprocal
        outs.append(o * pl.reciprocal(l, approx=True))
    return jnp.concatenate(outs, axis=-1)          # lane-dense (Sq, d)


def _self_attn_kernel(qkv_ref, o_ref, *, num_heads, scale):
    x = qkv_ref[0]                                  # (S, 3d) bf16
    d = x.shape[-1] // 3
    o = _mha_core(x[:, :d], x[:, d:2 * d], x[:, 2 * d:], num_heads, scale)
    o_ref[0] = o.astype(o_ref.dtype)


def _cross_attn_kernel(q_ref, kv_ref, o_ref, *, num_heads, scale):
    q = q_ref[0]                                    # (Sq, d)  bf16
    kv = kv_ref[0]                                  # (Sk, 2d) bf16
    d = q.shape[-1]
    o = _mha_core(q, kv[:, :d], kv[:, d:], num_heads, scale)
    o_ref[0] = o.astype(o_ref.dtype)


def pallas_self_attention(qkv, num_heads):
    """qkv: (B, S, 3d) packed projection -> (B, S, d); heads sliced in-kernel."""
    B, S, d3 = qkv.shape
    d = d3 // 3
    scale = 1.0 / math.sqrt(d // num_heads)
    block_bytes = S * d3 * 2 + S * d * 2
    return pl.pallas_call(
        functools.partial(_self_attn_kernel, num_heads=num_heads, scale=scale),
        out_shape=jax.ShapeDtypeStruct((B, S, d), jnp.bfloat16),
        grid=(B,),
        in_specs=[pl.BlockSpec((1, S, d3), lambda b: (b, 0, 0))],
        out_specs=pl.BlockSpec((1, S, d), lambda b: (b, 0, 0)),
        compiler_params=_mosaic_params(("parallel",), block_bytes),
    )(qkv.astype(jnp.bfloat16))


def pallas_cross_attention(q, kv, num_heads):
    """q: (B, Sq, d), kv: (B, Sk, 2d) packed K/V -> (B, Sq, d)."""
    B, Sq, d = q.shape
    Sk = kv.shape[1]
    scale = 1.0 / math.sqrt(d // num_heads)
    block_bytes = Sq * d * 2 + Sk * 2 * d * 2 + Sq * d * 2
    return pl.pallas_call(
        functools.partial(_cross_attn_kernel, num_heads=num_heads, scale=scale),
        out_shape=jax.ShapeDtypeStruct((B, Sq, d), jnp.bfloat16),
        grid=(B,),
        in_specs=[pl.BlockSpec((1, Sq, d), lambda b: (b, 0, 0)),
                  pl.BlockSpec((1, Sk, 2 * d), lambda b: (b, 0, 0))],
        out_specs=pl.BlockSpec((1, Sq, d), lambda b: (b, 0, 0)),
        compiler_params=_mosaic_params(("parallel",), block_bytes),
    )(q.astype(jnp.bfloat16), kv.astype(jnp.bfloat16))


def _mse_kernel(p_ref, t_ref, o_ref, *, inv_count):
    t = pl.program_id(0)
    d = p_ref[...].astype(jnp.float32) - t_ref[...].astype(jnp.float32)
    o_ref[t] = jnp.sum(d * d) * inv_count


def pallas_mse_per_frame(pred, target):
    """pred/target: (BS, T, P, D) -> per-frame MSE (T,).  Grid over frames."""
    BS, T, P, D = pred.shape
    inv_count = 1.0 / float(BS * P * D)
    block_bytes = 2 * BS * P * D * 4
    # TODO(synk): for very large BS*P*D, add a second (arbitrary) grid axis
    # over the batch with an SMEM accumulator.
    return pl.pallas_call(
        functools.partial(_mse_kernel, inv_count=inv_count),
        out_shape=jax.ShapeDtypeStruct((T,), jnp.float32),
        grid=(T,),
        in_specs=[pl.BlockSpec((BS, 1, P, D), lambda t: (0, t, 0, 0)),
                  pl.BlockSpec((BS, 1, P, D), lambda t: (0, t, 0, 0))],
        out_specs=pl.BlockSpec(memory_space=pltpu.MemorySpace.SMEM),
        compiler_params=_mosaic_params(("arbitrary",), block_bytes),
    )(pred.astype(jnp.float32), target.astype(jnp.float32))


# --------------------------- model building blocks -------------------------

def mha_self(x, p, num_heads, residual=None):
    """Self-attention with fused (d,3d) in-proj; residual fused into out-proj."""
    B, S, d = x.shape
    qkv = pallas_linear(x.reshape(B * S, d), p["w_qkv"], p["b_qkv"],
                        out_dtype=jnp.bfloat16)
    o = pallas_self_attention(qkv.reshape(B, S, 3 * d), num_heads)
    r = None if residual is None else residual.reshape(B * S, d)
    o = pallas_linear(o.reshape(B * S, d), p["wo"], p["bo"], residual=r)
    return o.reshape(B, S, d)


def mha_cross(x, memory, p, num_heads, residual=None):
    """Cross-attention: q-proj on x, fused (d,2d) kv-proj on memory."""
    B, Sq, d = x.shape
    Sk = memory.shape[1]
    q = pallas_linear(x.reshape(B * Sq, d), p["wq"], p["bq"],
                      out_dtype=jnp.bfloat16)
    kv = pallas_linear(memory.reshape(B * Sk, d), p["w_kv"], p["b_kv"],
                       out_dtype=jnp.bfloat16)
    o = pallas_cross_attention(q.reshape(B, Sq, d), kv.reshape(B, Sk, 2 * d),
                               num_heads)
    r = None if residual is None else residual.reshape(B * Sq, d)
    o = pallas_linear(o.reshape(B * Sq, d), p["wo"], p["bo"], residual=r)
    return o.reshape(B, Sq, d)


def transformer_decoder_layer(x, memory, p, num_heads, eps=1e-6):
    """nn.TransformerDecoderLayer (post-norm, relu, batch_first, eps=1e-6)."""
    B, S, d = x.shape
    sa = mha_self(x, p["self_attn"], num_heads)
    x = pallas_layer_norm(x.reshape(-1, d), p["norm1_w"], p["norm1_b"], eps,
                          residual=sa.reshape(-1, d)).reshape(B, S, d)
    ca = mha_cross(x, memory, p["cross_attn"], num_heads)
    x = pallas_layer_norm(x.reshape(-1, d), p["norm2_w"], p["norm2_b"], eps,
                          residual=ca.reshape(-1, d)).reshape(B, S, d)
    h = pallas_linear(x.reshape(-1, d), p["ff_w1"], p["ff_b1"],
                      activation="relu", out_dtype=jnp.bfloat16)
    h = pallas_linear(h, p["ff_w2"], p["ff_b2"])
    x = pallas_layer_norm(x.reshape(-1, d), p["norm3_w"], p["norm3_b"], eps,
                          residual=h).reshape(B, S, d)
    return x


def decoder_forward(memory, p, num_heads):
    """Decoder module: learned queries repeated over batch + decoder layers."""
    B = memory.shape[0]
    q = p["queries"]
    x = jnp.broadcast_to(q, (B, q.shape[1], q.shape[2]))
    for lp in p["layers"]:
        x = transformer_decoder_layer(x, memory, lp, num_heads)
    return x


def mask_vit_forward(images, p, num_heads, patch=16, eps=1e-6):
    """MaskViT stand-in: 16x16/s16 patch-embed (matmul) + pre-norm ViT blocks."""
    # TODO(synk): MaskViT source not provided; block mask (random_block_mask /
    # true_mask) is not applied and the encoder depth is a synthetic stand-in.
    N, C, H, W = images.shape
    fh, fw = H // patch, W // patch
    # TODO(synk): at production resolutions, fold this patchify transpose into
    # the embed kernel's DMA via a BlockSpec index_map over (fh, fw) tiles.
    patches = (images.reshape(N, C, fh, patch, fw, patch)
                     .transpose(0, 2, 4, 1, 3, 5)
                     .reshape(N * fh * fw, C * patch * patch))
    tokens = pallas_linear(patches, p["patch_w"], p["patch_b"])
    d = tokens.shape[-1]
    S = fh * fw
    x = tokens.reshape(N, S, d) + p["pos_emb"]        # glue: broadcast add
    for lp in p["layers"]:
        y = pallas_layer_norm(x.reshape(-1, d), lp["ln1_w"], lp["ln1_b"], eps)
        x = mha_self(y.reshape(N, S, d), lp["attn"], num_heads, residual=x)
        y = pallas_layer_norm(x.reshape(-1, d), lp["ln2_w"], lp["ln2_b"], eps)
        h = pallas_linear(y, lp["mlp_w1"], lp["mlp_b1"], activation="gelu",
                          out_dtype=jnp.bfloat16)
        x = pallas_linear(h, lp["mlp_w2"], lp["mlp_b2"],
                          residual=x.reshape(-1, d)).reshape(N, S, d)
    x = pallas_layer_norm(x.reshape(-1, d), p["ln_w"], p["ln_b"],
                          eps).reshape(N, S, d)
    return x


# ------------------------------ ViTJEPA forward -----------------------------

def vit_jepa_forward(batch_color, params, cfg):
    cams = cfg["cameras"]
    Te = cfg["num_encode_frames"]
    T = cfg["num_frames"]
    nh = cfg["num_heads"]
    fh, fw = cfg["feat_shape"]
    d = cfg["dim"]
    P = fh * fw

    # --- encode (masked) frames per camera ---
    all_feats = []
    for cam in cams:
        color = batch_color[cam]                     # (BS, T, C, H, W)
        feats = color[:, :Te]
        BS = feats.shape[0]
        flat = feats.reshape((BS * Te,) + feats.shape[2:])
        cam_feats = mask_vit_forward(flat, params["encoders"][cam], nh)
        cam_feats = cam_feats.reshape(BS, Te, P, d)
        cam_feats = cam_feats + params["encode_time_embedding"]
        all_feats.append(cam_feats.reshape(BS, Te * P, d))
    input_tokens = jnp.concatenate(all_feats, axis=1)

    # --- backbone Decoder ---
    input_tokens = decoder_forward(input_tokens, params["backbone"], nh)

    # --- per-camera targets / predictions / losses ---
    losses = {}
    ln_ones = jnp.ones((d,), jnp.float32)
    ln_zeros = jnp.zeros((d,), jnp.float32)
    for cam in cams:
        all_color = batch_color[cam]
        BS = all_color.shape[0]
        tgt = mask_vit_forward(
            all_color.reshape((BS * T,) + all_color.shape[2:]),
            params["ema_encoders"][cam], nh)
        # F.layer_norm(target_feats, (d,)): no affine, eps=1e-5
        tgt_ln = pallas_layer_norm(tgt.reshape(-1, d), ln_ones, ln_zeros,
                                   1e-5).reshape(BS, T, P, d)
        pred = decoder_forward(input_tokens, params["decoders"][cam], nh)
        pred = pred.reshape(BS, T, P, d)
        frame_losses = pallas_mse_per_frame(pred, tgt_ln)
        for frame in range(T):
            losses[f"cam_features/{cam}/{frame}"] = frame_losses[frame]
    # TODO(synk): EMA update, gradient checkpointing/autocast, tensorboard
    # logging and losses_backward are training-host glue; not kernels.
    return losses


# ------------------------------ parameter init ------------------------------

def _normal(key, shape, std=0.02):
    return std * jax.random.normal(key, shape, jnp.float32)


def _bf16(x):
    return x.astype(jnp.bfloat16)


def _init_self_attn(key, d):
    ks = jax.random.split(key, 2)
    return dict(
        w_qkv=_bf16(_normal(ks[0], (d, 3 * d))),
        b_qkv=jnp.zeros((3 * d,), jnp.float32),
        wo=_bf16(_normal(ks[1], (d, d))),
        bo=jnp.zeros((d,), jnp.float32),
    )


def _init_cross_attn(key, d):
    ks = jax.random.split(key, 3)
    return dict(
        wq=_bf16(_normal(ks[0], (d, d))), bq=jnp.zeros((d,), jnp.float32),
        w_kv=_bf16(_normal(ks[1], (d, 2 * d))),
        b_kv=jnp.zeros((2 * d,), jnp.float32),
        wo=_bf16(_normal(ks[2], (d, d))), bo=jnp.zeros((d,), jnp.float32),
    )


def _init_decoder_layer(key, d, mlp):
    ks = jax.random.split(key, 4)
    ones = jnp.ones((d,), jnp.float32)
    zeros = jnp.zeros((d,), jnp.float32)
    return dict(
        self_attn=_init_self_attn(ks[0], d),
        cross_attn=_init_cross_attn(ks[1], d),
        ff_w1=_bf16(_normal(ks[2], (d, mlp))),
        ff_b1=jnp.zeros((mlp,), jnp.float32),
        ff_w2=_bf16(_normal(ks[3], (mlp, d))), ff_b2=zeros,
        norm1_w=ones, norm1_b=zeros,
        norm2_w=ones, norm2_b=zeros,
        norm3_w=ones, norm3_b=zeros,
    )


def _init_decoder(key, num_queries, d, mlp, num_layers):
    ks = jax.random.split(key, num_layers + 1)
    return dict(
        queries=_normal(ks[0], (1, num_queries, d)),
        layers=[_init_decoder_layer(ks[i + 1], d, mlp)
                for i in range(num_layers)],
    )


def _init_encoder_layer(key, d, mlp):
    ks = jax.random.split(key, 3)
    ones = jnp.ones((d,), jnp.float32)
    zeros = jnp.zeros((d,), jnp.float32)
    return dict(
        attn=_init_self_attn(ks[0], d),
        ln1_w=ones, ln1_b=zeros,
        ln2_w=ones, ln2_b=zeros,
        mlp_w1=_bf16(_normal(ks[1], (d, mlp))),
        mlp_b1=jnp.zeros((mlp,), jnp.float32),
        mlp_w2=_bf16(_normal(ks[2], (mlp, d))),
        mlp_b2=zeros,
    )


def _init_encoder(key, C, patch, num_tokens, d, mlp, num_layers):
    ks = jax.random.split(key, num_layers + 2)
    return dict(
        patch_w=_bf16(_normal(ks[0], (C * patch * patch, d))),
        patch_b=jnp.zeros((d,), jnp.float32),
        pos_emb=_normal(ks[1], (1, num_tokens, d)),
        layers=[_init_encoder_layer(ks[i + 2], d, mlp)
                for i in range(num_layers)],
        ln_w=jnp.ones((d,), jnp.float32),
        ln_b=jnp.zeros((d,), jnp.float32),
    )


def init_params(key, cfg):
    cams = cfg["cameras"]
    n = len(cams)
    d, mlp = cfg["dim"], cfg["dim_feedforward"]
    fh, fw = cfg["feat_shape"]
    keys = jax.random.split(key, 2 * n + 2)
    params = dict(
        encoders={cam: _init_encoder(keys[i], cfg["channels"], 16, fh * fw,
                                     d, mlp, cfg["encoder_layers"])
                  for i, cam in enumerate(cams)},
        decoders={cam: _init_decoder(keys[n + i], cfg["num_frames"] * fh * fw,
                                     d, mlp, cfg["decoder_layers"])
                  for i, cam in enumerate(cams)},
        backbone=_init_decoder(
            keys[2 * n],
            cfg["backbone_queries"][0] * cfg["backbone_queries"][1],
            d, mlp, cfg["backbone_layers"]),
        encode_time_embedding=_normal(keys[2 * n + 1],
                                      (1, cfg["num_encode_frames"], 1, d)),
    )
    # AveragedModel deepcopy / first EMA update => identical to encoders.
    params["ema_encoders"] = params["encoders"]
    return params


# ----------------------------------- main -----------------------------------

if __name__ == "__main__":
    cfg = dict(
        cameras=["left", "right"],
        num_frames=2,
        num_encode_frames=1,
        cam_shape=(32, 32),          # -> feat_shape (2, 2); patch size 16
        channels=3,
        dim=32,                      # original 1024 (scaled down)
        dim_feedforward=64,          # original 4096
        num_heads=4,                 # original 16
        backbone_layers=2,           # original 24
        decoder_layers=2,            # original 12
        encoder_layers=1,            # MaskViT depth (source not provided)
        backbone_queries=(4, 4),     # original Decoder(cam_shape=(32, 32))
    )
    cfg["feat_shape"] = (cfg["cam_shape"][0] // 16, cfg["cam_shape"][1] // 16)

    key = jax.random.PRNGKey(0)
    k_param, k_data = jax.random.split(key)
    params = init_params(k_param, cfg)

    BS = 2
    data_keys = jax.random.split(k_data, len(cfg["cameras"]))
    batch_color = {
        cam: jax.random.normal(
            data_keys[i],
            (BS, cfg["num_frames"], cfg["channels"],
             cfg["cam_shape"][0], cfg["cam_shape"][1]),
            jnp.float32)
        for i, cam in enumerate(cfg["cameras"])
    }

    losses = vit_jepa_forward(batch_color, params, cfg)
    losses = jax.block_until_ready(losses)
    for name in sorted(losses):
        assert losses[name].shape == ()
        assert bool(jnp.isfinite(losses[name]))
    print("KERNEL_OK")
</pallas_src>

<mosaic_0001>
module attributes {stable_mosaic.version = 11 : i64} {
  func.func @_linear_kernel(%arg0: i32, %arg1: i32, %arg2: i32, %arg3: memref<8x256xbf16, #tpu.memory_space<vmem>>, %arg4: memref<256x32xbf16, #tpu.memory_space<vmem>>, %arg5: memref<1x32xf32, #tpu.memory_space<vmem>>, %arg6: memref<8x32xf32, #tpu.memory_space<vmem>>, %arg7: memref<8x32xf32, #tpu.memory_space<vmem>>) attributes {dimension_semantics = [#tpu.dimension_semantics<parallel>, #tpu.dimension_semantics<parallel>, #tpu.dimension_semantics<arbitrary>], iteration_bounds = array<i64: 1, 1, 3>, scalar_prefetch = 0 : i64, scratch_operands = 1 : i64, tpu.core_type = #tpu.core_type<tc>, window_params = [{transform_indices = @transform_0, window_bounds = array<i64: 8, 256>}, {transform_indices = @transform_1, window_bounds = array<i64: 256, 32>}, {transform_indices = @transform_2, window_bounds = array<i64: 1, 32>}, {transform_indices = @transform_3, window_bounds = array<i64: 8, 32>}]} {
    %c0_i32 = arith.constant 0 : i32
    %0 = arith.cmpi eq, %arg2, %c0_i32 : i32
    %1 = arith.extui %0 : i1 to i32
    %c0_i32_0 = arith.constant 0 : i32
    %2 = arith.cmpi ne, %1, %c0_i32_0 : i32
    scf.if %2 {
      %cst_9 = arith.constant 0.000000e+00 : f32
      %12 = vector.broadcast %cst_9 : f32 to vector<8x32xf32>
      %c0_10 = arith.constant 0 : index
      %c0_11 = arith.constant 0 : index
      %13 = vector.load %arg7[%c0_10, %c0_11] : memref<8x32xf32, #tpu.memory_space<vmem>>, vector<8x32xf32>
      tpu.vector_store %arg7[%c0_10, %c0_11], %12 {strides = array<i32>} : memref<8x32xf32, #tpu.memory_space<vmem>>, vector<8x32xf32>,
    } else {
    }
    %c0 = arith.constant 0 : index
    %c0_1 = arith.constant 0 : index
    %3 = vector.load %arg7[%c0, %c0_1] : memref<8x32xf32, #tpu.memory_space<vmem>>, vector<8x32xf32>
    %c0_2 = arith.constant 0 : index
    %c0_3 = arith.constant 0 : index
    %4 = vector.load %arg3[%c0_2, %c0_3] : memref<8x256xbf16, #tpu.memory_space<vmem>>, vector<8x256xbf16>
    %c0_4 = arith.constant 0 : index
    %c0_5 = arith.constant 0 : index
    %5 = vector.load %arg4[%c0_4, %c0_5] : memref<256x32xbf16, #tpu.memory_space<vmem>>, vector<256x32xbf16>
    %cst = arith.constant dense<0.000000e+00> : vector<8x32xf32>
    %6 = tpu.matmul %4, %5, %cst {dimension_numbers = #tpu.dot_dimension_numbers<[1], [0], [0], [1], [0, 0, 1, 1], [], []>} : vector<8x256xbf16>, vector<256x32xbf16>, vector<8x32xf32> -> vector<8x32xf32>
    %7 = arith.addf %3, %6 : vector<8x32xf32>
    %c0_6 = arith.constant 0 : index
    %c0_7 = arith.constant 0 : index
    %8 = vector.load %arg7[%c0_6, %c0_7] : memref<8x32xf32, #tpu.memory_space<vmem>>, vector<8x32xf32>
    tpu.vector_store %arg7[%c0_6, %c0_7], %7 {strides = array<i32>} : memref<8x32xf32, #tpu.memory_space<vmem>>, vector<8x32xf32>,
    %c2_i32 = arith.constant 2 : i32
    %9 = arith.cmpi eq, %arg2, %c2_i32 : i32
    %10 = arith.extui %9 : i1 to i32
    %c0_i32_8 = arith.constant 0 : i32
    %11 = arith.cmpi ne, %10, %c0_i32_8 : i32
    scf.if %11 {
      %c0_9 = arith.constant 0 : index
      %c0_10 = arith.constant 0 : index
      %12 = vector.load %arg7[%c0_9, %c0_10] : memref<8x32xf32, #tpu.memory_space<vmem>>, vector<8x32xf32>
      %c0_11 = arith.constant 0 : index
      %c0_12 = arith.constant 0 : index
      %13 = vector.load %arg5[%c0_11, %c0_12] : memref<1x32xf32, #tpu.memory_space<vmem>>, vector<1x32xf32>
      %14 = vector.broadcast %13 : vector<1x32xf32> to vector<8x32xf32>
      %15 = arith.addf %12, %14 : vector<8x32xf32>
      %c0_13 = arith.constant 0 : index
      %c0_14 = arith.constant 0 : index
      %16 = vector.load %arg6[%c0_13, %c0_14] : memref<8x32xf32, #tpu.memory_space<vmem>>, vector<8x32xf32>
      tpu.vector_store %arg6[%c0_13, %c0_14], %15 {strides = array<i32>} : memref<8x32xf32, #tpu.memory_space<vmem>>, vector<8x32xf32>,
    } else {
    }
    return
  }
  func.func @transform_0(%arg0: i32, %arg1: i32, %arg2: i32) -> (i32, i32) {
    %c0_i32 = arith.constant 0 : i32
    return %arg0, %arg2 : i32, i32
  }
  func.func @transform_1(%arg0: i32, %arg1: i32, %arg2: i32) -> (i32, i32) {
    %c0_i32 = arith.constant 0 : i32
    return %arg2, %arg1 : i32, i32
  }
  func.func @transform_2(%arg0: i32, %arg1: i32, %arg2: i32) -> (i32, i32) {
    %c0_i32 = arith.constant 0 : i32
    %c0_i32_0 = arith.constant 0 : i32
    return %c0_i32, %arg1 : i32, i32
  }
  func.func @transform_3(%arg0: i32, %arg1: i32, %arg2: i32) -> (i32, i32) {
    %c0_i32 = arith.constant 0 : i32
    return %arg0, %arg1 : i32, i32
  }
}

</mosaic_0001>

<llo_original>
// kernel: tpu_custom_call.1
$region0: #{tpu_custom_call.1}
  #allocation0 [shape = 'u32[]', space=smem, size = 0x4, offset = 0x4, fixed_abs, tag = 'smem constant byte address 0x4 - core index']
  #allocation1 [shape = 'u32[144,128]{1,0:T(1,128)}', space=vmem, size = 0x12000, scoped, tag = 'internal scratch']
  #allocation2 [shape = 'f32[8,32]{1,0:T(8,128)}', space=vmem, size = 0x1000, scoped, tag = 'scratch operand']
  %s0 = inlined_call_operand.vmem [shape: bf16[8,768], index: 0, kind: input, shape index: {}]
  %s1 = inlined_call_operand.vmem [shape: bf16[768,32], index: 1, kind: input, shape index: {}]
  %s2 = inlined_call_operand.vmem [shape: f32[1,32], index: 2, kind: input, shape index: {}]
  %s3 = inlined_call_operand.hbm [shape: f32[8,32], index: 3, kind: output, shape index: {}]
  %s4 = sld [smem:[#allocation0]]
  $region53: #{tpu_custom_call.1} parent=0
    _
  %s6 = ssub.s32 1, %s4
  %s7 = scalar_select 0, %s6, %s4
  $region1: #{tpu_custom_call.1} parent=0
    #allocation3 [shape = 'u8[4096]{0}', space=vmem, size = 0x1000, scoped, tag = 'output window, operand 0, single buffered']
    #allocation4 [shape = 's32[2]{0}', space=sflag, size = 0x8, scoped, tag = 'scoped memory for tpu_custom_call.1']
    %8 = vsyncpa [#allocation4], 0
    loop: start=0, step=1, limit=5
    $region2: #{tpu_custom_call.1} parent=1 // loop_pre_header
      _
    $region3: #{tpu_custom_call.1} parent=1 // loop_header
      %s10 = sphi 0, %s14
      %p11 = scmp.ge.s32.totalorder %s10, 5
      %s17 = sphi 0, %s36
      %s18 = sphi 0, %s32
      %s19 = sphi 0, %s28
      %s20 = sphi 0, %s17
      %s21 = sphi 0, %s18
      %s22 = sphi 0, %s19
      %s23 = sphi 0, %s20
      %s24 = sphi 0, %s21
      %s25 = sphi 0, %s22
      %s41 = sphi 0, %s43
      %s44 = sphi 0, %s41
      %s45 = sphi 0, %s44
      %s61 = sphi 0, %s45
      %s69 = sphi 0, %s71
      %s72 = sphi 0, %s69
      %s73 = sphi 0, %s72
      %s89 = sphi 0, %s73
      %s95 = sphi 0, %s97
      %s98 = sphi 0, %s95
      %s99 = sphi 0, %s98
      %s115 = sphi 0, %s99
      %s123 = sphi 0, %s125
      %s126 = sphi 0, %s123
      %s127 = sphi 0, %s126
      %s143 = sphi 0, %s127
    $region4: #{tpu_custom_call.1} parent=1 // loop_header_branch
      %13 = sbr.rel (%p11) target = $region8
    $region5: #{tpu_custom_call.1} parent=1 // loop_body
      %s15 = ssub.s32 %s10, 1
      %s16 = ssub.s32 %s10, 2
      %s26 = sadd.s32 1, %s19
      %p27 = scmp.ge.s32.totalorder %s26, 3
      %s28 = scalar_select %p27, 0, %s26
      %s29 = sadd.s32 1, %s18
      %s30 = scalar_select %p27, %s29, %s18
      %p31 = scmp.ge.s32.totalorder %s30, 1
      %s32 = scalar_select %p31, 0, %s30
      %s33 = sadd.s32 1, %s17
      %s34 = scalar_select %p31, %s33, %s17
      %p35 = scmp.ge.s32.totalorder %s34, 1
      %s36 = scalar_select %p35, 0, %s34
      %s37 = ssub.s32 %s17, %s36
      %s38 = ssub.s32 %s19, %s28
      %s39 = sor.u32 %s37, %s38
      %p40 = scmp.eq.s32.totalorder %s39, 0
      %s42 = sadd.s32 %s41, 1
      %s43 = scalar_select %p40, %s41, %s42
      %p46 = pneg %p40
      %p47 = scmp.eq.s32.totalorder %s10, 2
      %p48 = por %p46, %p47
      %p49 = scmp.ne.s32.totalorder %s41, %s44
      %p50 = scmp.eq.s32.totalorder %s10, 0
      %p51 = por %p49, %p50
      %p52 = scmp.ne.s32.totalorder %s41, %s44
      %p53 = scmp.eq.s32.totalorder %s15, 2
      %p54 = por %p52, %p53
      %p55 = scmp.ne.s32.totalorder %s44, %s45
      %p56 = scmp.eq.s32.totalorder %s15, 0
      %p57 = por %p55, %p56
      %p58 = scmp.ne.s32.totalorder %s44, %s45
      %p59 = scmp.eq.s32.totalorder %s16, 2
      %p60 = por %p58, %p59
      %p62 = scmp.ne.s32.totalorder %s45, %s61
      %p63 = scmp.eq.s32.totalorder %s16, 0
      %p64 = por %p62, %p63
      %s65 = ssub.s32 %s19, %s28
      %s66 = ssub.s32 %s18, %s32
      %s67 = sor.u32 %s65, %s66
      %p68 = scmp.eq.s32.totalorder %s67, 0
      %s70 = sadd.s32 %s69, 1
      %s71 = scalar_select %p68, %s69, %s70
      %p74 = pneg %p68
      %p75 = scmp.eq.s32.totalorder %s10, 2
      %p76 = por %p74, %p75
      %p77 = scmp.ne.s32.totalorder %s69, %s72
      %p78 = scmp.eq.s32.totalorder %s10, 0
      %p79 = por %p77, %p78
      %p80 = scmp.ne.s32.totalorder %s69, %s72
      %p81 = scmp.eq.s32.totalorder %s15, 2
      %p82 = por %p80, %p81
      %p83 = scmp.ne.s32.totalorder %s72, %s73
      %p84 = scmp.eq.s32.totalorder %s15, 0
      %p85 = por %p83, %p84
      %p86 = scmp.ne.s32.totalorder %s72, %s73
      %p87 = scmp.eq.s32.totalorder %s16, 2
      %p88 = por %p86, %p87
      %p90 = scmp.ne.s32.totalorder %s73, %s89
      %p91 = scmp.eq.s32.totalorder %s16, 0
      %p92 = por %p90, %p91
      %s93 = ssub.s32 %s18, %s32
      %p94 = scmp.eq.s32.totalorder %s93, 0
      %s96 = sadd.s32 %s95, 1
      %s97 = scalar_select %p94, %s95, %s96
      %p100 = pneg %p94
      %p101 = scmp.eq.s32.totalorder %s10, 2
      %p102 = por %p100, %p101
      %p103 = scmp.ne.s32.totalorder %s95, %s98
      %p104 = scmp.eq.s32.totalorder %s10, 0
      %p105 = por %p103, %p104
      %p106 = scmp.ne.s32.totalorder %s95, %s98
      %p107 = scmp.eq.s32.totalorder %s15, 2
      %p108 = por %p106, %p107
      %p109 = scmp.ne.s32.totalorder %s98, %s99
      %p110 = scmp.eq.s32.totalorder %s15, 0
      %p111 = por %p109, %p110
      %p112 = scmp.ne.s32.totalorder %s98, %s99
      %p113 = scmp.eq.s32.totalorder %s16, 2
      %p114 = por %p112, %p113
      %p116 = scmp.ne.s32.totalorder %s99, %s115
      %p117 = scmp.eq.s32.totalorder %s16, 0
      %p118 = por %p116, %p117
      %s119 = ssub.s32 %s17, %s36
      %s120 = ssub.s32 %s18, %s32
      %s121 = sor.u32 %s119, %s120
      %p122 = scmp.eq.s32.totalorder %s121, 0
      %s124 = sadd.s32 %s123, 1
      %s125 = scalar_select %p122, %s123, %s124
      %p128 = pneg %p122
      %p129 = scmp.eq.s32.totalorder %s10, 2
      %p130 = por %p128, %p129
      %p131 = scmp.ne.s32.totalorder %s123, %s126
      %p132 = scmp.eq.s32.totalorder %s10, 0
      %p133 = por %p131, %p132
      %p134 = scmp.ne.s32.totalorder %s123, %s126
      %p135 = scmp.eq.s32.totalorder %s15, 2
      %p136 = por %p134, %p135
      %p137 = scmp.ne.s32.totalorder %s126, %s127
      %p138 = scmp.eq.s32.totalorder %s15, 0
      %p139 = por %p137, %p138
      %p140 = scmp.ne.s32.totalorder %s126, %s127
      %p141 = scmp.eq.s32.totalorder %s16, 2
      %p142 = por %p140, %p141
      %p144 = scmp.ne.s32.totalorder %s127, %s143
      %p145 = scmp.eq.s32.totalorder %s16, 0
      %p146 = por %p144, %p145
      %p147 = scmp.le.s32.totalorder 1, %s10
      %p148 = scmp.lt.s32.totalorder %s10, 4
      %p149 = pnand %p147, %p148
      %p150 = pneg %p149
      // Predicated region
      $region9: #{tpu_custom_call.1} parent=5 // pred_check
        _
      $region10: #{tpu_custom_call.1} parent=5 // pred_check_branch
        %152 = sbr.rel (%p149) target = $region12
      $region11: #{tpu_custom_call.1} parent=5 // pred_region
        %s153 = ssub.s32 %s10, 1
        // Predicated region
        $region13: #{tpu_custom_call.1} parent=11 // pred_check
          %p154 = pneg %p111
        $region14: #{tpu_custom_call.1} parent=11 // pred_check_branch
          %156 = sbr.rel (%p154) target = $region16
        $region15: #{tpu_custom_call.1} parent=11 // pred_region
          %p157 = scmp.lt.s32.totalorder %s21, 0
          %s158 = scalar_select %p157, %s21, 0
          %s159 = scalar_lea.vmem %s2, %s158
        $region16: #{tpu_custom_call.1} parent=11 // pred_fallthru
          _
      $region12: #{tpu_custom_call.1} parent=5 // pred_fallthru
        _
      %p160 = scmp.lt.s32.totalorder %s10, 3
      // Predicated region
      $region17: #{tpu_custom_call.1} parent=5 // pred_check
        %p161 = pneg %p160
      $region18: #{tpu_custom_call.1} parent=5 // pred_check_branch
        %163 = sbr.rel (%p161) target = $region20
      $region19: #{tpu_custom_call.1} parent=5 // pred_region
        // Predicated region
        $region21: #{tpu_custom_call.1} parent=19 // pred_check
          %p164 = pneg %p51
        $region22: #{tpu_custom_call.1} parent=19 // pred_check_branch
          %166 = sbr.rel (%p164) target = $region24
        $region23: #{tpu_custom_call.1} parent=19 // pred_region
          %s167 = smul.u32 2, %s19
          %p168 = scmp.lt.s32.totalorder %s17, 0
          %s169 = scalar_select %p168, %s17, 0
          %p170 = scmp.lt.s32.totalorder %s167, 5
          %s171 = scalar_select %p170, %s167, 5
          %s172 = smul.addr %s169, 6
          %s173 = sadd.s32 %s171, %s172
          %s174 = smul.addr %s173, 4
          %s175 = scalar_lea.vmem %s0, %s174
          %s176 = smul.u32 2, %s19
        $region24: #{tpu_custom_call.1} parent=19 // pred_fallthru
          _
        // Predicated region
        $region25: #{tpu_custom_call.1} parent=19 // pred_check
          %p177 = pneg %p79
        $region26: #{tpu_custom_call.1} parent=19 // pred_check_branch
          %179 = sbr.rel (%p177) target = $region28
        $region27: #{tpu_custom_call.1} parent=19 // pred_region
          %s180 = smul.u32 32, %s19
          %p181 = scmp.lt.s32.totalorder %s180, 95
          %s182 = scalar_select %p181, %s180, 95
          %p183 = scmp.lt.s32.totalorder %s18, 0
          %s184 = scalar_select %p183, %s18, 0
          %s185 = sadd.s32 %s184, %s182
          %s186 = smul.addr %s185, 4
          %s187 = scalar_lea.vmem %s1, %s186
          %s188 = smul.u32 32, %s19
        $region28: #{tpu_custom_call.1} parent=19 // pred_fallthru
          _
      $region20: #{tpu_custom_call.1} parent=5 // pred_fallthru
        _
      %p189 = scmp.le.s32.totalorder 1, %s10
      %p190 = scmp.lt.s32.totalorder %s10, 4
      %p191 = pnand %p189, %p190
      %p192 = pneg %p191
      // Predicated region
      $region29: #{tpu_custom_call.1} parent=5 // pred_check
        _
      $region30: #{tpu_custom_call.1} parent=5 // pred_check_branch
        %194 = sbr.rel (%p191) target = $region32
      $region31: #{tpu_custom_call.1} parent=5 // pred_region
        %s195 = ssub.s32 %s10, 1
        %s196 = smul.u32 2, %s22
        %p197 = scmp.lt.s32.totalorder %s20, 0
        %s198 = scalar_select %p197, %s20, 0
        %p199 = scmp.lt.s32.totalorder %s196, 5
        %s200 = scalar_select %p199, %s196, 5
        %s201 = smul.addr %s198, 6
        %s202 = sadd.s32 %s200, %s201
        %s203 = smul.addr %s202, 4
        %s204 = scalar_lea.vmem %s0, %s203
        %p205 = pneg %p57
        %p206 = pneg %p54
        %s207 = smul.u32 32, %s22
        %p208 = scmp.lt.s32.totalorder %s207, 95
        %s209 = scalar_select %p208, %s207, 95
        %p210 = scmp.lt.s32.totalorder %s21, 0
        %s211 = scalar_select %p210, %s21, 0
        %s212 = sadd.s32 %s211, %s209
        %s213 = smul.addr %s212, 4
        %s214 = scalar_lea.vmem %s1, %s213
        %p215 = pneg %p85
        %p216 = pneg %p82
        %p217 = scmp.lt.s32.totalorder %s21, 0
        %s218 = scalar_select %p217, %s21, 0
        %s219 = scalar_lea.vmem %s2, %s218
        %p220 = pneg %p111
        %p221 = pneg %p108
        %p222 = pneg %p139
        %p223 = pneg %p136
        %s224 = smul.u32 2, %s22
        %p225 = scmp.lt.s32.totalorder %s20, 0
        %s226 = scalar_select %p225, %s20, 0
        %p227 = scmp.lt.s32.totalorder %s224, 5
        %s228 = scalar_select %p227, %s224, 5
        %s229 = smul.addr %s226, 6
        %s230 = sadd.s32 %s228, %s229
        %s231 = smul.addr %s230, 4
        %s232 = scalar_lea.vmem %s0, %s231
        %s233 = smul.u32 2, %s22
        %s234 = smul.u32 32, %s22
        %p235 = scmp.lt.s32.totalorder %s234, 95
        %s236 = scalar_select %p235, %s234, 95
        %p237 = scmp.lt.s32.totalorder %s21, 0
        %s238 = scalar_select %p237, %s21, 0
        %s239 = sadd.s32 %s238, %s236
        %s240 = smul.addr %s239, 4
        %s241 = scalar_lea.vmem %s1, %s240
        %s242 = smul.u32 32, %s22
        %p243 = scmp.lt.s32.totalorder %s21, 0
        %s244 = scalar_select %p243, %s21, 0
        %s245 = scalar_lea.vmem %s2, %s244
        %p247 = scmp.eq.s32.totalorder %s22, 0
        // Predicated region
        $region33: #{tpu_custom_call.1} parent=31 // pred_check
          %p248 = pneg %p247
        $region34: #{tpu_custom_call.1} parent=31 // pred_check_branch
          %250 = sbr.rel (%p248) target = $region36
        $region35: #{tpu_custom_call.1} parent=31 // pred_region
          %vm251 = vcmask 261120
          %252 = vst.msk [vmem:[#allocation2] sm:$0xff] %vm251, 0.0
        $region36: #{tpu_custom_call.1} parent=31 // pred_fallthru
          _
        %v253 = vld [vmem:[#allocation2] sm:$0xff]
        %v254 = vld [vmem:[%s232] sm:$0xff]
        %v255 = vld [vmem:[%s241] sm:$0xf]
        %v256 = vld [vmem:[%s241 + $0x4] sm:$0xf]
        %v257 = vld [vmem:[%s241 + $0x8] sm:$0xf]
        %v258 = vld [vmem:[%s241 + $0xc] sm:$0xf]
        %v259 = vld [vmem:[%s241 + $0x10] sm:$0xf]
        %v260 = vld [vmem:[%s241 + $0x14] sm:$0xf]
        %v261 = vld [vmem:[%s241 + $0x18] sm:$0xf]
        %v262 = vld [vmem:[%s241 + $0x1c] sm:$0xf]
        %v263 = vld [vmem:[%s241 + $0x20] sm:$0xf]
        %v264 = vld [vmem:[%s241 + $0x24] sm:$0xf]
        %v265 = vld [vmem:[%s241 + $0x28] sm:$0xf]
        %v266 = vld [vmem:[%s241 + $0x2c] sm:$0xf]
        %v267 = vld [vmem:[%s241 + $0x30] sm:$0xf]
        %v268 = vld [vmem:[%s241 + $0x34] sm:$0xf]
        %v269 = vld [vmem:[%s241 + $0x38] sm:$0xf]
        %v270 = vld [vmem:[%s241 + $0x3c] sm:$0xf]
        %v271 = vld [vmem:[%s241 + $0x40] sm:$0xf]
        %v272 = vld [vmem:[%s241 + $0x44] sm:$0xf]
        %v273 = vld [vmem:[%s241 + $0x48] sm:$0xf]
        %v274 = vld [vmem:[%s241 + $0x4c] sm:$0xf]
        %v275 = vld [vmem:[%s241 + $0x50] sm:$0xf]
        %v276 = vld [vmem:[%s241 + $0x54] sm:$0xf]
        %v277 = vld [vmem:[%s241 + $0x58] sm:$0xf]
        %v278 = vld [vmem:[%s241 + $0x5c] sm:$0xf]
        %v279 = vld [vmem:[%s241 + $0x60] sm:$0xf]
        %v280 = vld [vmem:[%s241 + $0x64] sm:$0xf]
        %v281 = vld [vmem:[%s241 + $0x68] sm:$0xf]
        %v282 = vld [vmem:[%s241 + $0x6c] sm:$0xf]
        %v283 = vld [vmem:[%s241 + $0x70] sm:$0xf]
        %v284 = vld [vmem:[%s241 + $0x74] sm:$0xf]
        %v285 = vld [vmem:[%s241 + $0x78] sm:$0xf]
        %v286 = vld [vmem:[%s241 + $0x7c] sm:$0xf]
        %v288 = vunpack.c.l.b16 %v254
        %v289 = vunpack.c.h.b16 %v254
        %v290 = vpack.c.b16 %v288, %v288
        %v291 = vpack.c.b16 %v289, %v289
        %v326 = vunpack.c.l.b16 %v255
        %v327 = vunpack.c.l.b16 %v256
        %v328 = vunpack.c.l.b16 %v257
        %v329 = vunpack.c.l.b16 %v258
        %v330 = vunpack.c.l.b16 %v259
        %v331 = vunpack.c.l.b16 %v260
        %v332 = vunpack.c.l.b16 %v261
        %v333 = vunpack.c.l.b16 %v262
        %v334 = vunpack.c.l.b16 %v263
        %v335 = vunpack.c.l.b16 %v264
        %v336 = vunpack.c.l.b16 %v265
        %v337 = vunpack.c.l.b16 %v266
        %v338 = vunpack.c.l.b16 %v267
        %v339 = vunpack.c.l.b16 %v268
        %v340 = vunpack.c.l.b16 %v269
        %v341 = vunpack.c.l.b16 %v270
        %v342 = vunpack.c.l.b16 %v271
        %v343 = vunpack.c.l.b16 %v272
        %v344 = vunpack.c.l.b16 %v273
        %v345 = vunpack.c.l.b16 %v274
        %v346 = vunpack.c.l.b16 %v275
        %v347 = vunpack.c.l.b16 %v276
        %v348 = vunpack.c.l.b16 %v277
        %v349 = vunpack.c.l.b16 %v278
        %v350 = vunpack.c.l.b16 %v279
        %v351 = vunpack.c.l.b16 %v280
        %v352 = vunpack.c.l.b16 %v281
        %v353 = vunpack.c.l.b16 %v282
        %v354 = vunpack.c.l.b16 %v283
        %v355 = vunpack.c.l.b16 %v284
        %v356 = vunpack.c.l.b16 %v285
        %v357 = vunpack.c.l.b16 %v286
        %v358 = vpack.c.b16 %v327, %v326
        %v359 = vpack.c.b16 %v329, %v328
        %v360 = vpack.c.b16 %v331, %v330
        %v361 = vpack.c.b16 %v333, %v332
        %v362 = vpack.c.b16 %v335, %v334
        %v363 = vpack.c.b16 %v337, %v336
        %v364 = vpack.c.b16 %v339, %v338
        %v365 = vpack.c.b16 %v341, %v340
        %v366 = vpack.c.b16 %v343, %v342
        %v367 = vpack.c.b16 %v345, %v344
        %v368 = vpack.c.b16 %v347, %v346
        %v369 = vpack.c.b16 %v349, %v348
        %v370 = vpack.c.b16 %v351, %v350
        %v371 = vpack.c.b16 %v353, %v352
        %v372 = vpack.c.b16 %v355, %v354
        %v373 = vpack.c.b16 %v357, %v356
        %390 = vmatprep.subr.bf16.mxu0 0
        %391 = vmatpush1.bf16.msra.mxu0 %v358
        %392 = vmatprep.subr.bf16.mxu0 0
        %393 = vmatpush1.bf16.msra.mxu0 %v359
        %394 = vmatprep.subr.bf16.mxu0 0
        %395 = vmatpush1.bf16.msra.mxu0 %v360
        %396 = vmatprep.subr.bf16.mxu0 0
        %397 = vmatpush1.bf16.msra.mxu0 %v361
        %398 = vmatprep.subr.bf16.mxu0 0
        %399 = vmatpush1.bf16.msra.mxu0 %v362
        %400 = vmatprep.subr.bf16.mxu0 0
        %401 = vmatpush1.bf16.msra.mxu0 %v363
        %402 = vmatprep.subr.bf16.mxu0 0
        %403 = vmatpush1.bf16.msra.mxu0 %v364
        %404 = vmatprep.subr.bf16.mxu0 0
        %405 = vmatpush1.bf16.msra.mxu0 %v365
        %406 = vmatprep.subr.bf16.mxu0 0
        %407 = vmatpush1.bf16.msra.mxu0 %v366
        %408 = vmatprep.subr.bf16.mxu0 0
        %409 = vmatpush1.bf16.msra.mxu0 %v367
        %410 = vmatprep.subr.bf16.mxu0 0
        %411 = vmatpush1.bf16.msra.mxu0 %v368
        %412 = vmatprep.subr.bf16.mxu0 0
        %413 = vmatpush1.bf16.msra.mxu0 %v369
        %414 = vmatprep.subr.bf16.mxu0 0
        %415 = vmatpush1.bf16.msra.mxu0 %v370
        %416 = vmatprep.subr.bf16.mxu0 0
        %417 = vmatpush1.bf16.msra.mxu0 %v371
        %418 = vmatprep.subr.bf16.mxu0 0
        %419 = vmatpush1.bf16.msra.mxu0 %v372
        %420 = vmatprep.subr.bf16.mxu0 0
        %421 = vmatpush1.bf16.msra.mxu0 %v373
        %422 = vmatprep.mubr.bf16.mxu0 %v291
        %423 = vmatmul.mubr.bf16.gmra.mrb[0].mxu0 %v290
        %v424 = vpop.f32.mrb[0].mxu0
        %v425 = vadd.f32 0.0, %v424
        %v426 = vpop.f32.mrb[0].mxu0
        %v427 = vpop.f32.mrb[0].mxu0
        %v428 = vpop.f32.mrb[0].mxu0
        %429 = vdwg.mxu0
        %v430 = vadd.f32 %v253, %v425
        %vm431 = vcmask 261120
        %432 = vst.msk [vmem:[#allocation2] sm:$0xff] %vm431, %v430
        %p433 = scmp.eq.s32.totalorder %s22, 2
        // Predicated region
        $region37: #{tpu_custom_call.1} parent=31 // pred_check
          %p434 = pneg %p433
        $region38: #{tpu_custom_call.1} parent=31 // pred_check_branch
          %436 = sbr.rel (%p434) target = $region40
        $region39: #{tpu_custom_call.1} parent=31 // pred_region
          %v437 = vld [vmem:[#allocation2] sm:$0xff]
          %v438 = vld [vmem:[%s245] sm:$0x1]
          %v440 = vlaneseq
          %v441 = vshrl.u32 %v440, 7
          %v442 = vsub.s32 0, %v441
          %v443 = vrot.slane %v438, %v442
          %v445 = vadd.f32 %v437, %v443
          %446 = vst.msk [vmem:[#allocation3] sm:$0xff] %vm431, %v445
        $region40: #{tpu_custom_call.1} parent=31 // pred_fallthru
          _
        // Predicated region
        $region41: #{tpu_custom_call.1} parent=31 // pred_check
          %p447 = pneg %p136
        $region42: #{tpu_custom_call.1} parent=31 // pred_check_branch
          %449 = sbr.rel (%p447) target = $region44
        $region43: #{tpu_custom_call.1} parent=31 // pred_region
          %s451 = ssub.s32 128, 128
          %452 = vsyncadd [#allocation4], %s451
          %s453 = sadd.s32 %s21, %s20
          %s454 = smul.addr %s453, 128
          %s455 = scalar_lea.hbm %s3, %s454
          %s457 = sshll.u32 [#allocation3], 4
          %s458 = int_to_ptr.vmem [resolvable:$true] %s457
          %460 = dma.vmem_to_hbm [thread:$0]  %s458, 128, %s455, [#allocation4]
        $region44: #{tpu_custom_call.1} parent=31 // pred_fallthru
          _
        // Predicated region
        $region45: #{tpu_custom_call.1} parent=31 // pred_check
          %p461 = pneg %p136
        $region46: #{tpu_custom_call.1} parent=31 // pred_check_branch
          %463 = sbr.rel (%p461) target = $region48
        $region47: #{tpu_custom_call.1} parent=31 // pred_region
          %464 = dma.done [#allocation4], 128
        $region48: #{tpu_custom_call.1} parent=31 // pred_fallthru
          _
      $region32: #{tpu_custom_call.1} parent=5 // pred_fallthru
        _
      %p465 = scmp.le.s32.totalorder 2, %s10
      // Predicated region
      $region49: #{tpu_custom_call.1} parent=5 // pred_check
        %p466 = pneg %p465
      $region50: #{tpu_custom_call.1} parent=5 // pred_check_branch
        %468 = sbr.rel (%p466) target = $region52
      $region51: #{tpu_custom_call.1} parent=5 // pred_region
        %s469 = ssub.s32 %s10, 2
      $region52: #{tpu_custom_call.1} parent=5 // pred_fallthru
        _
    $region6: #{tpu_custom_call.1} parent=1 // loop_footer
      %s14 = sadd.s32 1, %s10
    $region7: #{tpu_custom_call.1} parent=1 // loop_footer_branch
      %9 = sbr.rel target = $region3
    $region8: #{tpu_custom_call.1} parent=1 // loop_exit
      _
    %470 = vsyncpa [#allocation4], 1
    %s471 = scalar_lea.sflag [#allocation4], 1
    %472 = vsyncpa %s471, 1

</llo_original>
